<compile_context>
chip_gen: v7x
topology: tpu7x:2x2x1
jax: 0.10.0
libtpu: 0.0.40
codegen_flags: <defaults>
</compile_context>

<pallas_src>
import functools

import jax
import jax.numpy as jnp
from jax import lax
from jax.experimental import pallas as pl
from jax.experimental.pallas import tpu as pltpu


# Clamp on the sum of squares (~1e-12 clamp on the norm, like F.normalize eps):
# avoids 0/0 -> NaN for an all-zero descriptor column.
_EPS_SUMSQ = 1e-24


def _block_size(requested, dim):
    """Lane/sublane friendly tile: full dim if small, else a multiple of 128."""
    if requested >= dim or dim <= 128:
        return dim
    return max(128, (min(requested, dim) // 128) * 128)


def _vmem_limit_bytes(tm, tn, c, in_bytes, out_bytes):
    """Generation-aware scoped-VMEM limit derived from the tile working set."""
    per_step = (tm * c + c * tn) * in_bytes           # descriptor blocks
    per_step += (tm + tn) * 4                         # row/col sum vectors
    per_step += tm * tn * out_bytes                   # output tile
    need = 2 * per_step + 3 * tm * tn * 4             # double-buffering + f32 temporaries
    try:
        capacity = int(pltpu.get_tpu_info().vmem_capacity_bytes)
    except Exception:                                 # conservative fallback
        capacity = 64 * 1024 * 1024                   # v7x per-TensorCore VMEM
    ceiling = (capacity * 5) // 8                     # ~40 MiB on v7x, ~80 MiB on v5e/v6e
    return int(min(ceiling, max(32 * 1024 * 1024, 2 * need)))


def _sim_tile(s_ref, t_ref):
    # s_ref: (1, tm, c), t_ref: (1, c, tn) -> sim (tm, tn) f32.
    # 1/temperature is already folded into the pre-normalized source scale.
    return lax.dot_general(
        s_ref[0], t_ref[0],
        dimension_numbers=(((1,), (0,)), ((), ())),
        preferred_element_type=jnp.float32)


def _fused_sums_kernel(s_ref, t_ref, rowsum_ref, colpart_ref, *, inv_temp):
    """Single sweep: rowsum accumulates over n tiles; per-m-tile colsum partials."""
    @pl.when(pl.program_id(2) == 0)
    def _():
        rowsum_ref[...] = jnp.zeros_like(rowsum_ref)

    e = jnp.exp(_sim_tile(s_ref, t_ref) - inv_temp)                     # (tm, tn), <= ~1
    rowsum_ref[...] += jnp.sum(e, axis=1, keepdims=True)[None]          # (1, tm, 1)
    colpart_ref[...] = jnp.sum(e, axis=0, keepdims=True)[None, None]    # (1, 1, 1, tn)


def _confidence_kernel(s_ref, t_ref, rowsum_ref, colsum_ref, out_ref, *,
                       inv_temp, bf16_epilogue):
    sim = _sim_tile(s_ref, t_ref)                                       # (tm, tn) f32
    # Reciprocals act on (tm, 1) / (1, tn) vectors only — hoisted off the tile.
    inv_row = 1.0 / rowsum_ref[0]                                       # (tm, 1)
    inv_col = 1.0 / colsum_ref[0]                                       # (1, tn)
    if bf16_epilogue:
        # bf16 exp + products (EUP/VPU are bf16-capable on v6e/v7x).
        e = jnp.exp((sim - inv_temp).astype(jnp.bfloat16))
        out = (e * inv_row.astype(jnp.bfloat16)) * (e * inv_col.astype(jnp.bfloat16))
    else:
        e = jnp.exp(sim - inv_temp)
        # softmax(dim=1) * softmax(dim=2) = e^2 / (colsum[n] * rowsum[m])
        out = (e * inv_row) * (e * inv_col)
    out_ref[0] = out.astype(out_ref.dtype)


def correspondence_module(source_desc, target_desc, temperature=0.1, *,
                          block_m=512, block_n=1024, out_dtype=None,
                          use_bf16_matmul=False, use_bf16_exp=False):
    """Pallas implementation of CorrespondenceModule(match_type='dual_softmax').

    source_desc, target_desc: (b, c, h, w).  Returns the (b, h*w, h*w) confidence
    matrix.  out_dtype=jnp.bfloat16 is strongly recommended for large h*w (halves
    the dominant HBM writeback); defaults to the input dtype for exact parity
    with the PyTorch module.
    """
    b, c, h, w = source_desc.shape
    bt, ct, ht, wt = target_desc.shape
    assert (b, c) == (bt, ct), "source/target batch and channel dims must match"
    m = h * w
    n = ht * wt
    inv_temp = float(1.0 / temperature)
    if 2.0 * inv_temp > 80.0:
        # TODO(synk): add a per-axis-max softmax fallback for temperature < ~0.025,
        # where the constant-shift single-exp trick can underflow whole rows.
        raise NotImplementedError("temperature too small for constant-shift softmax")

    bf16 = jnp.dtype(jnp.bfloat16)
    out_dtype = jnp.dtype(source_desc.dtype if out_dtype is None else out_dtype)
    mm_dtype = jnp.bfloat16 if (use_bf16_matmul or source_desc.dtype == bf16) else jnp.float32
    bf16_epilogue = bool(use_bf16_exp) and out_dtype == bf16

    tm = _block_size(block_m, m)
    tn = _block_size(block_n, n)
    m_tiles = (m + tm - 1) // tm
    n_tiles = (n + tn - 1) // tn
    m_p = m_tiles * tm
    n_p = n_tiles * tn

    # One-shot pre-pass (O(b*c*(m+n)), noise next to the m*n work): L2-normalize
    # over channels, fold 1/T into the source scale, cast to the matmul dtype,
    # lay the source out as (b, m, c), and zero-pad m/n to tile multiples.
    def _normalize(x, scale):
        x = x.astype(jnp.float32)
        sumsq = jnp.sum(x * x, axis=1, keepdims=True)
        return x * (scale * lax.rsqrt(jnp.maximum(sumsq, _EPS_SUMSQ)))

    src = _normalize(source_desc.reshape(b, c, m), inv_temp).astype(mm_dtype)
    tgt = _normalize(target_desc.reshape(b, c, n), 1.0).astype(mm_dtype)
    src = jnp.pad(jnp.swapaxes(src, 1, 2), ((0, 0), (0, m_p - m), (0, 0)))   # (b, m_p, c)
    tgt = jnp.pad(tgt, ((0, 0), (0, 0), (0, n_p - n)))                       # (b, c, n_p)

    vmem_limit = _vmem_limit_bytes(tm, tn, c, jnp.dtype(mm_dtype).itemsize,
                                   out_dtype.itemsize)

    # Pass 1: fused row sums + column-sum partials in a single sweep.
    rowsum, colpart = pl.pallas_call(
        functools.partial(_fused_sums_kernel, inv_temp=inv_temp),
        out_shape=(jax.ShapeDtypeStruct((b, m_p, 1), jnp.float32),
                   jax.ShapeDtypeStruct((b, m_tiles, 1, n_p), jnp.float32)),
        grid=(b, m_tiles, n_tiles),
        in_specs=[
            pl.BlockSpec((1, tm, c), lambda bi, mi, ni: (bi, mi, 0)),
            pl.BlockSpec((1, c, tn), lambda bi, mi, ni: (bi, 0, ni)),
        ],
        out_specs=(
            pl.BlockSpec((1, tm, 1), lambda bi, mi, ni: (bi, mi, 0)),
            pl.BlockSpec((1, 1, 1, tn), lambda bi, mi, ni: (bi, mi, 0, ni)),
        ),
        compiler_params=pltpu.CompilerParams(
            dimension_semantics=("parallel", "parallel", "arbitrary"),
            vmem_limit_bytes=vmem_limit),
    )(src, tgt)

    # Reduce the tiny (b, m_tiles, 1, n_p) column partials and subtract the known
    # exp(-1/T) contribution of the zero-padded rows/columns.
    pad_const = jnp.exp(jnp.float32(-inv_temp))
    colsum = jnp.sum(colpart, axis=1)                                    # (b, 1, n_p)
    if m_p > m:
        colsum = colsum - jnp.float32(m_p - m) * pad_const
    if n_p > n:
        rowsum = rowsum - jnp.float32(n_p - n) * pad_const

    # Pass 2: tiled confidence matrix; sim is recomputed per tile (cheap c-deep
    # MXU matmul) instead of spilling an f32 m*n matrix to HBM.
    out = pl.pallas_call(
        functools.partial(_confidence_kernel, inv_temp=inv_temp,
                          bf16_epilogue=bf16_epilogue),
        out_shape=jax.ShapeDtypeStruct((b, m, n), out_dtype),
        grid=(b, m_tiles, n_tiles),
        in_specs=[
            pl.BlockSpec((1, tm, c), lambda bi, mi, ni: (bi, mi, 0)),
            pl.BlockSpec((1, c, tn), lambda bi, mi, ni: (bi, 0, ni)),
            pl.BlockSpec((1, tm, 1), lambda bi, mi, ni: (bi, mi, 0)),
            pl.BlockSpec((1, 1, tn), lambda bi, mi, ni: (bi, 0, ni)),
        ],
        out_specs=pl.BlockSpec((1, tm, tn), lambda bi, mi, ni: (bi, mi, ni)),
        compiler_params=pltpu.CompilerParams(
            dimension_semantics=("parallel", "parallel", "parallel"),
            vmem_limit_bytes=vmem_limit),
    )(src, tgt, rowsum, colsum)
    # TODO(synk): the biggest remaining win is fusing the downstream consumer
    # (e.g. mutual-nearest-neighbour selection) so the m*n matrix never hits HBM.
    return out


def _reference(source_desc, target_desc, temperature=0.1):
    # Pure-JAX reference mirroring the PyTorch forward.
    b, c, h, w = source_desc.shape
    s = source_desc / jnp.linalg.norm(source_desc, axis=1, keepdims=True)
    t = target_desc / jnp.linalg.norm(target_desc, axis=1, keepdims=True)
    s = s.reshape(b, c, h * w)
    t = t.reshape(b, c, -1)
    sim = jnp.einsum("bcm,bcn->bmn", s, t) / temperature
    return jax.nn.softmax(sim, axis=1) * jax.nn.softmax(sim, axis=2)


if __name__ == "__main__":
    key = jax.random.PRNGKey(0)
    k1, k2, k3, k4 = jax.random.split(key, 4)

    # Test 1: multi-tile, tile-aligned grid (2x2 tiles per batch element).
    b, c, h, w = 2, 4, 16, 16
    src = jax.random.normal(k1, (b, c, h, w), dtype=jnp.float32)
    tgt = jax.random.normal(k2, (b, c, h, w), dtype=jnp.float32)
    out = jax.block_until_ready(
        correspondence_module(src, tgt, block_m=128, block_n=128))
    ref = _reference(src, tgt)
    assert out.shape == (b, h * w, h * w)
    err = float(jnp.max(jnp.abs(out - ref)))
    assert jnp.allclose(out, ref, rtol=1e-4, atol=1e-6), (
        f"f32 mismatch vs pure-JAX reference (max abs err {err})")

    # Test 2: ragged spatial size exercising the zero-pad + constant-correction path.
    b2, c2, h2, w2 = 1, 8, 10, 20
    src2 = jax.random.normal(k3, (b2, c2, h2, w2), dtype=jnp.float32)
    tgt2 = jax.random.normal(k4, (b2, c2, h2, w2), dtype=jnp.float32)
    out2 = jax.block_until_ready(
        correspondence_module(src2, tgt2, block_m=128, block_n=128))
    ref2 = _reference(src2, tgt2)
    assert out2.shape == (b2, h2 * w2, h2 * w2)
    err2 = float(jnp.max(jnp.abs(out2 - ref2)))
    assert jnp.allclose(out2, ref2, rtol=1e-4, atol=1e-6), (
        f"ragged mismatch vs pure-JAX reference (max abs err {err2})")

    # Test 3: recommended fast path — bf16 output + bf16 exp epilogue, default tiles.
    out3 = jax.block_until_ready(
        correspondence_module(src, tgt, out_dtype=jnp.bfloat16, use_bf16_exp=True))
    assert out3.dtype == jnp.bfloat16
    err3 = float(jnp.max(jnp.abs(out3.astype(jnp.float32) - ref)))
    assert jnp.allclose(out3.astype(jnp.float32), ref, rtol=5e-2, atol=1e-3), (
        f"bf16 mismatch vs pure-JAX reference (max abs err {err3})")

    print("KERNEL_OK")
</pallas_src>

<mosaic_0001>
module attributes {stable_mosaic.version = 11 : i64} {
  func.func @_fused_sums_kernel(%arg0: i32, %arg1: i32, %arg2: i32, %arg3: memref<1x128x4xf32, #tpu.memory_space<vmem>>, %arg4: memref<1x4x128xf32, #tpu.memory_space<vmem>>, %arg5: memref<1x128x1xf32, #tpu.memory_space<vmem>>, %arg6: memref<1x1x1x128xf32, #tpu.memory_space<vmem>>) attributes {dimension_semantics = [#tpu.dimension_semantics<parallel>, #tpu.dimension_semantics<parallel>, #tpu.dimension_semantics<arbitrary>], iteration_bounds = array<i64: 2, 2, 2>, scalar_prefetch = 0 : i64, scratch_operands = 0 : i64, tpu.core_type = #tpu.core_type<tc>, window_params = [{transform_indices = @transform_0, window_bounds = array<i64: 1, 128, 4>}, {transform_indices = @transform_1, window_bounds = array<i64: 1, 4, 128>}, {transform_indices = @transform_2, window_bounds = array<i64: 1, 128, 1>}, {transform_indices = @transform_3, window_bounds = array<i64: 1, 1, 1, 128>}]} {
    %c0_i32 = arith.constant 0 : i32
    %0 = arith.cmpi eq, %arg2, %c0_i32 : i32
    %1 = arith.extui %0 : i1 to i32
    %c0_i32_0 = arith.constant 0 : i32
    %2 = arith.cmpi ne, %1, %c0_i32_0 : i32
    scf.if %2 {
      %cst_19 = arith.constant 0.000000e+00 : f32
      %21 = vector.broadcast %cst_19 : f32 to vector<1x128x1xf32>
      %c0_20 = arith.constant 0 : index
      %c0_21 = arith.constant 0 : index
      %c0_22 = arith.constant 0 : index
      %22 = vector.load %arg5[%c0_20, %c0_21, %c0_22] : memref<1x128x1xf32, #tpu.memory_space<vmem>>, vector<1x128x1xf32>
      tpu.vector_store %arg5[%c0_20, %c0_21, %c0_22], %21 {strides = array<i32>} : memref<1x128x1xf32, #tpu.memory_space<vmem>>, vector<1x128x1xf32>,
    } else {
    }
    %c0 = arith.constant 0 : index
    %c0_1 = arith.constant 0 : index
    %c0_2 = arith.constant 0 : index
    %3 = vector.load %arg3[%c0, %c0_1, %c0_2] : memref<1x128x4xf32, #tpu.memory_space<vmem>>, vector<1x128x4xf32>
    %4 = vector.shape_cast %3 : vector<1x128x4xf32> to vector<128x4xf32>
    %c0_3 = arith.constant 0 : index
    %c0_4 = arith.constant 0 : index
    %c0_5 = arith.constant 0 : index
    %5 = vector.load %arg4[%c0_3, %c0_4, %c0_5] : memref<1x4x128xf32, #tpu.memory_space<vmem>>, vector<1x4x128xf32>
    %6 = vector.shape_cast %5 : vector<1x4x128xf32> to vector<4x128xf32>
    %cst = arith.constant dense<0.000000e+00> : vector<128x128xf32>
    %7 = tpu.matmul %4, %6, %cst {dimension_numbers = #tpu.dot_dimension_numbers<[1], [0], [0], [1], [0, 0, 1, 1], [], []>} : vector<128x4xf32>, vector<4x128xf32>, vector<128x128xf32> -> vector<128x128xf32>
    %cst_6 = arith.constant 1.000000e+01 : f32
    %8 = vector.broadcast %cst_6 : f32 to vector<128x128xf32>
    %9 = arith.subf %7, %8 : vector<128x128xf32>
    %10 = math.exp %9 : vector<128x128xf32>
    %c0_7 = arith.constant 0 : index
    %c0_8 = arith.constant 0 : index
    %c0_9 = arith.constant 0 : index
    %11 = vector.load %arg5[%c0_7, %c0_8, %c0_9] : memref<1x128x1xf32, #tpu.memory_space<vmem>>, vector<1x128x1xf32>
    %cst_10 = arith.constant dense<0.000000e+00> : vector<128xf32>
    %12 = vector.multi_reduction <add>, %10, %cst_10 [1] : vector<128x128xf32> to vector<128xf32>
    %13 = vector.shape_cast %12 : vector<128xf32> to vector<128x1xf32>
    %14 = vector.shape_cast %13 : vector<128x1xf32> to vector<1x128x1xf32>
    %15 = arith.addf %11, %14 : vector<1x128x1xf32>
    %c0_11 = arith.constant 0 : index
    %c0_12 = arith.constant 0 : index
    %c0_13 = arith.constant 0 : index
    %16 = vector.load %arg5[%c0_11, %c0_12, %c0_13] : memref<1x128x1xf32, #tpu.memory_space<vmem>>, vector<1x128x1xf32>
    tpu.vector_store %arg5[%c0_11, %c0_12, %c0_13], %15 {strides = array<i32>} : memref<1x128x1xf32, #tpu.memory_space<vmem>>, vector<1x128x1xf32>,
    %cst_14 = arith.constant dense<0.000000e+00> : vector<128xf32>
    %17 = vector.multi_reduction <add>, %10, %cst_14 [0] : vector<128x128xf32> to vector<128xf32>
    %18 = vector.shape_cast %17 : vector<128xf32> to vector<1x128xf32>
    %19 = vector.shape_cast %18 : vector<1x128xf32> to vector<1x1x1x128xf32>
    %c0_15 = arith.constant 0 : index
    %c0_16 = arith.constant 0 : index
    %c0_17 = arith.constant 0 : index
    %c0_18 = arith.constant 0 : index
    %20 = vector.load %arg6[%c0_15, %c0_16, %c0_17, %c0_18] : memref<1x1x1x128xf32, #tpu.memory_space<vmem>>, vector<1x1x1x128xf32>
    tpu.vector_store %arg6[%c0_15, %c0_16, %c0_17, %c0_18], %19 {strides = array<i32>} : memref<1x1x1x128xf32, #tpu.memory_space<vmem>>, vector<1x1x1x128xf32>,
    return
  }
  func.func @transform_0(%arg0: i32, %arg1: i32, %arg2: i32) -> (i32, i32, i32) {
    %c0_i32 = arith.constant 0 : i32
    %c0_i32_0 = arith.constant 0 : i32
    return %arg0, %arg1, %c0_i32 : i32, i32, i32
  }
  func.func @transform_1(%arg0: i32, %arg1: i32, %arg2: i32) -> (i32, i32, i32) {
    %c0_i32 = arith.constant 0 : i32
    %c0_i32_0 = arith.constant 0 : i32
    return %arg0, %c0_i32, %arg2 : i32, i32, i32
  }
  func.func @transform_2(%arg0: i32, %arg1: i32, %arg2: i32) -> (i32, i32, i32) {
    %c0_i32 = arith.constant 0 : i32
    %c0_i32_0 = arith.constant 0 : i32
    return %arg0, %arg1, %c0_i32 : i32, i32, i32
  }
  func.func @transform_3(%arg0: i32, %arg1: i32, %arg2: i32) -> (i32, i32, i32, i32) {
    %c0_i32 = arith.constant 0 : i32
    %c0_i32_0 = arith.constant 0 : i32
    return %arg0, %arg1, %c0_i32, %arg2 : i32, i32, i32, i32
  }
}

</mosaic_0001>

<llo_original>
// kernel: tpu_custom_call.1
$region0: #{tpu_custom_call.1}
  #allocation0 [shape = 'u32[]', space=smem, size = 0x4, offset = 0x4, fixed_abs, tag = 'smem constant byte address 0x4 - core index']
  #allocation1 [shape = 'u32[144,128]{1,0:T(1,128)}', space=vmem, size = 0x12000, scoped, tag = 'internal scratch']
  %s0 = inlined_call_operand.vmem [shape: f32[2,256,4], index: 0, kind: input, shape index: {}]
  %s1 = inlined_call_operand.vmem [shape: f32[2,4,256], index: 1, kind: input, shape index: {}]
  %s2 = inlined_call_operand.vmem [shape: f32[2,256,1], index: 2, kind: output, shape index: {0}]
  %s3 = inlined_call_operand.hbm [shape: f32[2,2,1,256], index: 3, kind: output, shape index: {1}]
  %4 = xla_tuple %s2, %s3
  %s5 = sld [smem:[#allocation0]]
  $region53: #{tpu_custom_call.1} parent=0
    _
  %s7 = ssub.s32 1, %s5
  %s8 = scalar_select 0, %s7, %s5
  $region1: #{tpu_custom_call.1} parent=0
    #allocation2 [shape = 'u8[1024]{0}', space=vmem, size = 0x400, scoped, tag = 'output window, operand 1']
    #allocation3 [shape = 's32[2]{0}', space=sflag, size = 0x8, scoped, tag = 'scoped memory for tpu_custom_call.1']
    %9 = vsyncpa [#allocation3], 0
    %s10 = scalar_lea.sflag [#allocation3], 1
    %11 = vsyncpa %s10, 0
    loop: start=0, step=1, limit=10
    $region2: #{tpu_custom_call.1} parent=1 // loop_pre_header
      _
    $region3: #{tpu_custom_call.1} parent=1 // loop_header
      %s13 = sphi 0, %s17
      %p14 = scmp.ge.s32.totalorder %s13, 10
      %s20 = sphi 0, %s39
      %s21 = sphi 0, %s35
      %s22 = sphi 0, %s31
      %s23 = sphi 0, %s20
      %s24 = sphi 0, %s21
      %s25 = sphi 0, %s22
      %s26 = sphi 0, %s23
      %s27 = sphi 0, %s24
      %s28 = sphi 0, %s25
      %s44 = sphi 0, %s46
      %s47 = sphi 0, %s44
      %s48 = sphi 0, %s47
      %s64 = sphi 0, %s48
      %s72 = sphi 0, %s74
      %s75 = sphi 0, %s72
      %s76 = sphi 0, %s75
      %s92 = sphi 0, %s76
      %s100 = sphi 0, %s102
      %s103 = sphi 0, %s100
      %s104 = sphi 0, %s103
      %s120 = sphi 0, %s104
      %s130 = sphi 0, %s132
      %s133 = sphi 0, %s130
      %s134 = sphi 0, %s133
      %s150 = sphi 0, %s134
    $region4: #{tpu_custom_call.1} parent=1 // loop_header_branch
      %16 = sbr.rel (%p14) target = $region8
    $region5: #{tpu_custom_call.1} parent=1 // loop_body
      %s18 = ssub.s32 %s13, 1
      %s19 = ssub.s32 %s13, 2
      %s29 = sadd.s32 1, %s22
      %p30 = scmp.ge.s32.totalorder %s29, 2
      %s31 = scalar_select %p30, 0, %s29
      %s32 = sadd.s32 1, %s21
      %s33 = scalar_select %p30, %s32, %s21
      %p34 = scmp.ge.s32.totalorder %s33, 2
      %s35 = scalar_select %p34, 0, %s33
      %s36 = sadd.s32 1, %s20
      %s37 = scalar_select %p34, %s36, %s20
      %p38 = scmp.ge.s32.totalorder %s37, 2
      %s39 = scalar_select %p38, 0, %s37
      %s40 = ssub.s32 %s20, %s39
      %s41 = ssub.s32 %s21, %s35
      %s42 = sor.u32 %s40, %s41
      %p43 = scmp.eq.s32.totalorder %s42, 0
      %s45 = sadd.s32 %s44, 1
      %s46 = scalar_select %p43, %s44, %s45
      %p49 = pneg %p43
      %p50 = scmp.eq.s32.totalorder %s13, 7
      %p51 = por %p49, %p50
      %p52 = scmp.ne.s32.totalorder %s44, %s47
      %p53 = scmp.eq.s32.totalorder %s13, 0
      %p54 = por %p52, %p53
      %p55 = scmp.ne.s32.totalorder %s44, %s47
      %p56 = scmp.eq.s32.totalorder %s18, 7
      %p57 = por %p55, %p56
      %p58 = scmp.ne.s32.totalorder %s47, %s48
      %p59 = scmp.eq.s32.totalorder %s18, 0
      %p60 = por %p58, %p59
      %p61 = scmp.ne.s32.totalorder %s47, %s48
      %p62 = scmp.eq.s32.totalorder %s19, 7
      %p63 = por %p61, %p62
      %p65 = scmp.ne.s32.totalorder %s48, %s64
      %p66 = scmp.eq.s32.totalorder %s19, 0
      %p67 = por %p65, %p66
      %s68 = ssub.s32 %s20, %s39
      %s69 = ssub.s32 %s22, %s31
      %s70 = sor.u32 %s68, %s69
      %p71 = scmp.eq.s32.totalorder %s70, 0
      %s73 = sadd.s32 %s72, 1
      %s74 = scalar_select %p71, %s72, %s73
      %p77 = pneg %p71
      %p78 = scmp.eq.s32.totalorder %s13, 7
      %p79 = por %p77, %p78
      %p80 = scmp.ne.s32.totalorder %s72, %s75
      %p81 = scmp.eq.s32.totalorder %s13, 0
      %p82 = por %p80, %p81
      %p83 = scmp.ne.s32.totalorder %s72, %s75
      %p84 = scmp.eq.s32.totalorder %s18, 7
      %p85 = por %p83, %p84
      %p86 = scmp.ne.s32.totalorder %s75, %s76
      %p87 = scmp.eq.s32.totalorder %s18, 0
      %p88 = por %p86, %p87
      %p89 = scmp.ne.s32.totalorder %s75, %s76
      %p90 = scmp.eq.s32.totalorder %s19, 7
      %p91 = por %p89, %p90
      %p93 = scmp.ne.s32.totalorder %s76, %s92
      %p94 = scmp.eq.s32.totalorder %s19, 0
      %p95 = por %p93, %p94
      %s96 = ssub.s32 %s20, %s39
      %s97 = ssub.s32 %s21, %s35
      %s98 = sor.u32 %s96, %s97
      %p99 = scmp.eq.s32.totalorder %s98, 0
      %s101 = sadd.s32 %s100, 1
      %s102 = scalar_select %p99, %s100, %s101
      %p105 = pneg %p99
      %p106 = scmp.eq.s32.totalorder %s13, 7
      %p107 = por %p105, %p106
      %p108 = scmp.ne.s32.totalorder %s100, %s103
      %p109 = scmp.eq.s32.totalorder %s13, 0
      %p110 = por %p108, %p109
      %p111 = scmp.ne.s32.totalorder %s100, %s103
      %p112 = scmp.eq.s32.totalorder %s18, 7
      %p113 = por %p111, %p112
      %p114 = scmp.ne.s32.totalorder %s103, %s104
      %p115 = scmp.eq.s32.totalorder %s18, 0
      %p116 = por %p114, %p115
      %p117 = scmp.ne.s32.totalorder %s103, %s104
      %p118 = scmp.eq.s32.totalorder %s19, 7
      %p119 = por %p117, %p118
      %p121 = scmp.ne.s32.totalorder %s104, %s120
      %p122 = scmp.eq.s32.totalorder %s19, 0
      %p123 = por %p121, %p122
      %s124 = ssub.s32 %s20, %s39
      %s125 = ssub.s32 %s21, %s35
      %s126 = sor.u32 %s124, %s125
      %s127 = ssub.s32 %s22, %s31
      %s128 = sor.u32 %s126, %s127
      %p129 = scmp.eq.s32.totalorder %s128, 0
      %s131 = sadd.s32 %s130, 1
      %s132 = scalar_select %p129, %s130, %s131
      %p135 = pneg %p129
      %p136 = scmp.eq.s32.totalorder %s13, 7
      %p137 = por %p135, %p136
      %p138 = scmp.ne.s32.totalorder %s130, %s133
      %p139 = scmp.eq.s32.totalorder %s13, 0
      %p140 = por %p138, %p139
      %p141 = scmp.ne.s32.totalorder %s130, %s133
      %p142 = scmp.eq.s32.totalorder %s18, 7
      %p143 = por %p141, %p142
      %p144 = scmp.ne.s32.totalorder %s133, %s134
      %p145 = scmp.eq.s32.totalorder %s18, 0
      %p146 = por %p144, %p145
      %p147 = scmp.ne.s32.totalorder %s133, %s134
      %p148 = scmp.eq.s32.totalorder %s19, 7
      %p149 = por %p147, %p148
      %p151 = scmp.ne.s32.totalorder %s134, %s150
      %p152 = scmp.eq.s32.totalorder %s19, 0
      %p153 = por %p151, %p152
      %p154 = scmp.le.s32.totalorder 1, %s13
      %p155 = scmp.lt.s32.totalorder %s13, 9
      %p156 = pnand %p154, %p155
      %p157 = pneg %p156
      // Predicated region
      $region9: #{tpu_custom_call.1} parent=5 // pred_check
        _
      $region10: #{tpu_custom_call.1} parent=5 // pred_check_branch
        %159 = sbr.rel (%p156) target = $region12
      $region11: #{tpu_custom_call.1} parent=5 // pred_region
        %s160 = ssub.s32 %s13, 1
      $region12: #{tpu_custom_call.1} parent=5 // pred_fallthru
        _
      %p161 = scmp.lt.s32.totalorder %s13, 8
      // Predicated region
      $region13: #{tpu_custom_call.1} parent=5 // pred_check
        %p162 = pneg %p161
      $region14: #{tpu_custom_call.1} parent=5 // pred_check_branch
        %164 = sbr.rel (%p162) target = $region16
      $region15: #{tpu_custom_call.1} parent=5 // pred_region
        // Predicated region
        $region17: #{tpu_custom_call.1} parent=15 // pred_check
          %p165 = pneg %p54
        $region18: #{tpu_custom_call.1} parent=15 // pred_check_branch
          %167 = sbr.rel (%p165) target = $region20
        $region19: #{tpu_custom_call.1} parent=15 // pred_region
          %s168 = smul.u32 16, %s21
          %p169 = scmp.lt.s32.totalorder %s20, 1
          %s170 = scalar_select %p169, %s20, 1
          %p171 = scmp.lt.s32.totalorder %s168, 31
          %s172 = scalar_select %p171, %s168, 31
          %s173 = smul.addr %s170, 32
          %s174 = sadd.s32 %s172, %s173
          %s175 = smul.addr %s174, 8
          %s176 = scalar_lea.vmem %s0, %s175
          %s177 = smul.u32 16, %s21
        $region20: #{tpu_custom_call.1} parent=15 // pred_fallthru
          _
        // Predicated region
        $region21: #{tpu_custom_call.1} parent=15 // pred_check
          %p178 = pneg %p82
        $region22: #{tpu_custom_call.1} parent=15 // pred_check_branch
          %180 = sbr.rel (%p178) target = $region24
        $region23: #{tpu_custom_call.1} parent=15 // pred_region
          %p181 = scmp.lt.s32.totalorder %s20, 1
          %s182 = scalar_select %p181, %s20, 1
          %p183 = scmp.lt.s32.totalorder %s22, 1
          %s184 = scalar_select %p183, %s22, 1
          %s185 = smul.addr %s182, 2
          %s186 = sadd.s32 %s184, %s185
          %s187 = smul.addr %s186, 4
          %s188 = scalar_lea.vmem %s1, %s187
        $region24: #{tpu_custom_call.1} parent=15 // pred_fallthru
          _
      $region16: #{tpu_custom_call.1} parent=5 // pred_fallthru
        _
      %p189 = scmp.le.s32.totalorder 1, %s13
      %p190 = scmp.lt.s32.totalorder %s13, 9
      %p191 = pnand %p189, %p190
      %p192 = pneg %p191
      // Predicated region
      $region25: #{tpu_custom_call.1} parent=5 // pred_check
        _
      $region26: #{tpu_custom_call.1} parent=5 // pred_check_branch
        %194 = sbr.rel (%p191) target = $region28
      $region27: #{tpu_custom_call.1} parent=5 // pred_region
        %s195 = ssub.s32 %s13, 1
        %s196 = smul.u32 16, %s24
        %p197 = scmp.lt.s32.totalorder %s23, 1
        %s198 = scalar_select %p197, %s23, 1
        %p199 = scmp.lt.s32.totalorder %s196, 31
        %s200 = scalar_select %p199, %s196, 31
        %s201 = smul.addr %s198, 32
        %s202 = sadd.s32 %s200, %s201
        %s203 = smul.addr %s202, 8
        %s204 = scalar_lea.vmem %s0, %s203
        %p205 = pneg %p60
        %p206 = pneg %p57
        %p207 = scmp.lt.s32.totalorder %s23, 1
        %s208 = scalar_select %p207, %s23, 1
        %p209 = scmp.lt.s32.totalorder %s25, 1
        %s210 = scalar_select %p209, %s25, 1
        %s211 = smul.addr %s208, 2
        %s212 = sadd.s32 %s210, %s211
        %s213 = smul.addr %s212, 4
        %s214 = scalar_lea.vmem %s1, %s213
        %p215 = pneg %p88
        %p216 = pneg %p85
        %p217 = pneg %p116
        %p218 = pneg %p113
        %s219 = smul.u32 16, %s24
        %p220 = scmp.lt.s32.totalorder %s23, 1
        %s221 = scalar_select %p220, %s23, 1
        %p222 = scmp.lt.s32.totalorder %s219, 31
        %s223 = scalar_select %p222, %s219, 31
        %s224 = smul.addr %s221, 32
        %s225 = sadd.s32 %s223, %s224
        %s226 = smul.addr %s225, 8
        %s227 = scalar_lea.vmem %s2, %s226
        %p228 = pneg %p146
        %p229 = pneg %p143
        %s230 = sand.u32 %s133, 1
        %s231 = scalar_lea.sflag [#allocation3], %s230
        %s232 = sand.u32 %s133, 1
        %s233 = scalar_lea.vmem [#allocation2], %s232
        %s234 = smul.u32 16, %s24
        %p235 = scmp.lt.s32.totalorder %s23, 1
        %s236 = scalar_select %p235, %s23, 1
        %p237 = scmp.lt.s32.totalorder %s234, 31
        %s238 = scalar_select %p237, %s234, 31
        %s239 = smul.addr %s236, 32
        %s240 = sadd.s32 %s238, %s239
        %s241 = smul.addr %s240, 8
        %s242 = scalar_lea.vmem %s0, %s241
        %s243 = smul.u32 16, %s24
        %p244 = scmp.lt.s32.totalorder %s23, 1
        %s245 = scalar_select %p244, %s23, 1
        %p246 = scmp.lt.s32.totalorder %s25, 1
        %s247 = scalar_select %p246, %s25, 1
        %s248 = smul.addr %s245, 2
        %s249 = sadd.s32 %s247, %s248
        %s250 = smul.addr %s249, 4
        %s251 = scalar_lea.vmem %s1, %s250
        %s252 = smul.u32 16, %s24
        %p253 = scmp.lt.s32.totalorder %s23, 1
        %s254 = scalar_select %p253, %s23, 1
        %p255 = scmp.lt.s32.totalorder %s252, 31
        %s256 = scalar_select %p255, %s252, 31
        %s257 = smul.addr %s254, 32
        %s258 = sadd.s32 %s256, %s257
        %s259 = smul.addr %s258, 8
        %s260 = scalar_lea.vmem %s2, %s259
        %s261 = smul.u32 16, %s24
        %p262 = scmp.eq.s32.totalorder %s25, 0
        // Predicated region
        $region29: #{tpu_custom_call.1} parent=27 // pred_check
          %p263 = pneg %p262
        $region30: #{tpu_custom_call.1} parent=27 // pred_check_branch
          %265 = sbr.rel (%p263) target = $region32
        $region31: #{tpu_custom_call.1} parent=27 // pred_region
          %vm266 = vcmask 7168
          %267 = vst.msk [vmem:[%s260] sm:$0xff] %vm266, 0.0
          %268 = vst.msk [vmem:[%s260 + $0x8] sm:$0xff] %vm266, 0.0
          %269 = vst.msk [vmem:[%s260 + $0x10] sm:$0xff] %vm266, 0.0
          %270 = vst.msk [vmem:[%s260 + $0x18] sm:$0xff] %vm266, 0.0
          %271 = vst.msk [vmem:[%s260 + $0x20] sm:$0xff] %vm266, 0.0
          %272 = vst.msk [vmem:[%s260 + $0x28] sm:$0xff] %vm266, 0.0
          %273 = vst.msk [vmem:[%s260 + $0x30] sm:$0xff] %vm266, 0.0
          %274 = vst.msk [vmem:[%s260 + $0x38] sm:$0xff] %vm266, 0.0
          %275 = vst.msk [vmem:[%s260 + $0x40] sm:$0xff] %vm266, 0.0
          %276 = vst.msk [vmem:[%s260 + $0x48] sm:$0xff] %vm266, 0.0
          %277 = vst.msk [vmem:[%s260 + $0x50] sm:$0xff] %vm266, 0.0
          %278 = vst.msk [vmem:[%s260 + $0x58] sm:$0xff] %vm266, 0.0
          %279 = vst.msk [vmem:[%s260 + $0x60] sm:$0xff] %vm266, 0.0
          %280 = vst.msk [vmem:[%s260 + $0x68] sm:$0xff] %vm266, 0.0
          %281 = vst.msk [vmem:[%s260 + $0x70] sm:$0xff] %vm266, 0.0
          %282 = vst.msk [vmem:[%s260 + $0x78] sm:$0xff] %vm266, 0.0
        $region32: #{tpu_custom_call.1} parent=27 // pred_fallthru
          _
        %v283 = vld [vmem:[%s242] sm:$0xff]
        %v284 = vld [vmem:[%s242 + $0x8] sm:$0xff]
        %v285 = vld [vmem:[%s242 + $0x10] sm:$0xff]
        %v286 = vld [vmem:[%s242 + $0x18] sm:$0xff]
        %v287 = vld [vmem:[%s242 + $0x20] sm:$0xff]
        %v288 = vld [vmem:[%s242 + $0x28] sm:$0xff]
        %v289 = vld [vmem:[%s242 + $0x30] sm:$0xff]
        %v290 = vld [vmem:[%s242 + $0x38] sm:$0xff]
        %v291 = vld [vmem:[%s242 + $0x40] sm:$0xff]
        %v292 = vld [vmem:[%s242 + $0x48] sm:$0xff]
        %v293 = vld [vmem:[%s242 + $0x50] sm:$0xff]
        %v294 = vld [vmem:[%s242 + $0x58] sm:$0xff]
        %v295 = vld [vmem:[%s242 + $0x60] sm:$0xff]
        %v296 = vld [vmem:[%s242 + $0x68] sm:$0xff]
        %v297 = vld [vmem:[%s242 + $0x70] sm:$0xff]
        %v298 = vld [vmem:[%s242 + $0x78] sm:$0xff]
        %v299 = vld [vmem:[%s251] sm:$0xf]
        %vm300 = vcmask 31744
        %v302 = vsel %vm300, %v283, 0
        %v305 = vsel %vm300, %v284, 0
        %v308 = vsel %vm300, %v285, 0
        %v311 = vsel %vm300, %v286, 0
        %v314 = vsel %vm300, %v287, 0
        %v317 = vsel %vm300, %v288, 0
        %v320 = vsel %vm300, %v289, 0
        %v323 = vsel %vm300, %v290, 0
        %v326 = vsel %vm300, %v291, 0
        %v329 = vsel %vm300, %v292, 0
        %v332 = vsel %vm300, %v293, 0
        %v335 = vsel %vm300, %v294, 0
        %v338 = vsel %vm300, %v295, 0
        %v341 = vsel %vm300, %v296, 0
        %v344 = vsel %vm300, %v297, 0
        %v347 = vsel %vm300, %v298, 0
        %vm349 = vcmask 1043456
        %v351 = vsel %vm349, %v299, 0
        %353 = vmatprep.subr.mxu0 0.0
        %354 = vmatpush1.msra.mxu0 %v351
        %355 = vmatprep.subr.mxu0 0.0
        %356 = vmatpush1.msra.mxu0 0.0
        %357 = vmatprep.subr.mxu0 0.0
        %358 = vmatpush1.msra.mxu0 0.0
        %359 = vmatprep.subr.mxu0 0.0
        %360 = vmatpush1.msra.mxu0 0.0
        %361 = vmatprep.subr.mxu0 0.0
        %362 = vmatpush1.msra.mxu0 0.0
        %363 = vmatprep.subr.mxu0 0.0
        %364 = vmatpush1.msra.mxu0 0.0
        %365 = vmatprep.subr.mxu0 0.0
        %366 = vmatpush1.msra.mxu0 0.0
        %367 = vmatprep.subr.mxu0 0.0
        %368 = vmatpush1.msra.mxu0 0.0
        %369 = vmatprep.subr.mxu0 0.0
        %370 = vmatpush1.msra.mxu0 0.0
        %371 = vmatprep.subr.mxu0 0.0
        %372 = vmatpush1.msra.mxu0 0.0
        %373 = vmatprep.subr.mxu0 0.0
        %374 = vmatpush1.msra.mxu0 0.0
        %375 = vmatprep.subr.mxu0 0.0
        %376 = vmatpush1.msra.mxu0 0.0
        %377 = vmatprep.subr.mxu0 0.0
        %378 = vmatpush1.msra.mxu0 0.0
        %379 = vmatprep.subr.mxu0 0.0
        %380 = vmatpush1.msra.mxu0 0.0
        %381 = vmatprep.subr.mxu0 0.0
        %382 = vmatpush1.msra.mxu0 0.0
        %383 = vmatprep.subr.mxu0 0.0
        %384 = vmatpush1.msra.mxu0 0.0
        %385 = vmatprep.subr.mxu0 0.0
        %386 = vmatpush1.msra.mxu0 0.0
        %387 = vmatprep.subr.mxu0 0.0
        %388 = vmatpush1.msra.mxu0 0.0
        %389 = vmatprep.subr.mxu0 0.0
        %390 = vmatpush1.msra.mxu0 0.0
        %391 = vmatprep.subr.mxu0 0.0
        %392 = vmatpush1.msra.mxu0 0.0
        %393 = vmatprep.subr.mxu0 0.0
        %394 = vmatpush1.msra.mxu0 0.0
        %395 = vmatprep.subr.mxu0 0.0
        %396 = vmatpush1.msra.mxu0 0.0
        %397 = vmatprep.subr.mxu0 0.0
        %398 = vmatpush1.msra.mxu0 0.0
        %399 = vmatprep.subr.mxu0 0.0
        %400 = vmatpush1.msra.mxu0 0.0
        %401 = vmatprep.subr.mxu0 0.0
        %402 = vmatpush1.msra.mxu0 0.0
        %403 = vmatprep.subr.mxu0 0.0
        %404 = vmatpush1.msra.mxu0 0.0
        %405 = vmatprep.subr.mxu0 0.0
        %406 = vmatpush1.msra.mxu0 0.0
        %407 = vmatprep.subr.mxu0 0.0
        %408 = vmatpush1.msra.mxu0 0.0
        %409 = vmatprep.subr.mxu0 0.0
        %410 = vmatpush1.msra.mxu0 0.0
        %411 = vmatprep.subr.mxu0 0.0
        %412 = vmatpush1.msra.mxu0 0.0
        %413 = vmatprep.subr.mxu0 0.0
        %414 = vmatpush1.msra.mxu0 0.0
        %415 = vmatprep.subr.mxu0 0.0
        %416 = vmatpush1.msra.mxu0 0.0
        %417 = vmatprep.mubr.f32.mxu0 0.0
        %418 = vmatmul.mubr.f32.gmra.mrb[0].mxu0 %v302
        %v419 = vpop.f32.mrb[0].mxu0
        %v420 = vadd.f32 0.0, %v419
        %v421 = vpop.f32.mrb[0].mxu0
        %422 = vmatprep.mubr.f32.mxu0 0.0
        %423 = vmatmul.mubr.f32.gmra.mrb[0].mxu0 %v305
        %v424 = vpop.f32.mrb[0].mxu0
        %v425 = vadd.f32 0.0, %v424
        %v426 = vpop.f32.mrb[0].mxu0
        %427 = vmatprep.mubr.f32.mxu0 0.0
        %428 = vmatmul.mubr.f32.gmra.mrb[0].mxu0 %v308
        %v429 = vpop.f32.mrb[0].mxu0
        %v430 = vadd.f32 0.0, %v429
        %v431 = vpop.f32.mrb[0].mxu0
        %432 = vmatprep.mubr.f32.mxu0 0.0
        %433 = vmatmul.mubr.f32.gmra.mrb[0].mxu0 %v311
        %v434 = vpop.f32.mrb[0].mxu0
        %v435 = vadd.f32 0.0, %v434
        %v436 = vpop.f32.mrb[0].mxu0
        %437 = vmatprep.mubr.f32.mxu0 0.0
        %438 = vmatmul.mubr.f32.gmra.mrb[0].mxu0 %v314
        %v439 = vpop.f32.mrb[0].mxu0
        %v440 = vadd.f32 0.0, %v439
        %v441 = vpop.f32.mrb[0].mxu0
        %442 = vmatprep.mubr.f32.mxu0 0.0
        %443 = vmatmul.mubr.f32.gmra.mrb[0].mxu0 %v317
        %v444 = vpop.f32.mrb[0].mxu0
        %v445 = vadd.f32 0.0, %v444
        %v446 = vpop.f32.mrb[0].mxu0
        %447 = vmatprep.mubr.f32.mxu0 0.0
        %448 = vmatmul.mubr.f32.gmra.mrb[0].mxu0 %v320
        %v449 = vpop.f32.mrb[0].mxu0
        %v450 = vadd.f32 0.0, %v449
        %v451 = vpop.f32.mrb[0].mxu0
        %452 = vmatprep.mubr.f32.mxu0 0.0
        %453 = vmatmul.mubr.f32.gmra.mrb[0].mxu0 %v323
        %v454 = vpop.f32.mrb[0].mxu0
        %v455 = vadd.f32 0.0, %v454
        %v456 = vpop.f32.mrb[0].mxu0
        %457 = vmatprep.mubr.f32.mxu0 0.0
        %458 = vmatmul.mubr.f32.gmra.mrb[0].mxu0 %v326
        %v459 = vpop.f32.mrb[0].mxu0
        %v460 = vadd.f32 0.0, %v459
        %v461 = vpop.f32.mrb[0].mxu0
        %462 = vmatprep.mubr.f32.mxu0 0.0
        %463 = vmatmul.mubr.f32.gmra.mrb[0].mxu0 %v329
        %v464 = vpop.f32.mrb[0].mxu0
        %v465 = vadd.f32 0.0, %v464
        %v466 = vpop.f32.mrb[0].mxu0
        %467 = vmatprep.mubr.f32.mxu0 0.0
        %468 = vmatmul.mubr.f32.gmra.mrb[0].mxu0 %v332
        %v469 = vpop.f32.mrb[0].mxu0
        %v470 = vadd.f32 0.0, %v469
        %v471 = vpop.f32.mrb[0].mxu0
        %472 = vmatprep.mubr.f32.mxu0 0.0
        %473 = vmatmul.mubr.f32.gmra.mrb[0].mxu0 %v335
        %v474 = vpop.f32.mrb[0].mxu0
        %v475 = vadd.f32 0.0, %v474
        %v476 = vpop.f32.mrb[0].mxu0
        %477 = vmatprep.mubr.f32.mxu0 0.0
        %478 = vmatmul.mubr.f32.gmra.mrb[0].mxu0 %v338
        %v479 = vpop.f32.mrb[0].mxu0
        %v480 = vadd.f32 0.0, %v479
        %v481 = vpop.f32.mrb[0].mxu0
        %482 = vmatprep.mubr.f32.mxu0 0.0
        %483 = vmatmul.mubr.f32.gmra.mrb[0].mxu0 %v341
        %v484 = vpop.f32.mrb[0].mxu0
        %v485 = vadd.f32 0.0, %v484
        %v486 = vpop.f32.mrb[0].mxu0
        %487 = vmatprep.mubr.f32.mxu0 0.0
        %488 = vmatmul.mubr.f32.gmra.mrb[0].mxu0 %v344
        %v489 = vpop.f32.mrb[0].mxu0
        %v490 = vadd.f32 0.0, %v489
        %v491 = vpop.f32.mrb[0].mxu0
        %492 = vmatprep.mubr.f32.mxu0 0.0
        %493 = vmatmul.mubr.f32.gmra.mrb[0].mxu0 %v347
        %v494 = vpop.f32.mrb[0].mxu0
        %v495 = vadd.f32 0.0, %v494
        %v496 = vpop.f32.mrb[0].mxu0
        %497 = vdwg.mxu0
        %v498 = vsub.f32 %v420, 10.0
        %v499 = vsub.f32 %v425, 10.0
        %v500 = vsub.f32 %v430, 10.0
        %v501 = vsub.f32 %v435, 10.0
        %v502 = vsub.f32 %v440, 10.0
        %v503 = vsub.f32 %v445, 10.0
        %v504 = vsub.f32 %v450, 10.0
        %v505 = vsub.f32 %v455, 10.0
        %v506 = vsub.f32 %v460, 10.0
        %v507 = vsub.f32 %v465, 10.0
        %v508 = vsub.f32 %v470, 10.0
        %v509 = vsub.f32 %v475, 10.0
        %v510 = vsub.f32 %v480, 10.0
        %v511 = vsub.f32 %v485, 10.0
        %v512 = vsub.f32 %v490, 10.0
        %v513 = vsub.f32 %v495, 10.0
        %v514 = vmul.f32 %v498, 1.442695
        %v515 = vpow.pop %v514
        %v516 = vmul.f32 %v499, 1.442695
        %v517 = vpow.pop %v516
        %v518 = vmul.f32 %v500, 1.442695
        %v519 = vpow.pop %v518
        %v520 = vmul.f32 %v501, 1.442695
        %v521 = vpow.pop %v520
        %v522 = vmul.f32 %v502, 1.442695
        %v523 = vpow.pop %v522
        %v524 = vmul.f32 %v503, 1.442695
        %v525 = vpow.pop %v524
        %v526 = vmul.f32 %v504, 1.442695
        %v527 = vpow.pop %v526
        %v528 = vmul.f32 %v505, 1.442695
        %v529 = vpow.pop %v528
        %v530 = vmul.f32 %v506, 1.442695
        %v531 = vpow.pop %v530
        %v532 = vmul.f32 %v507, 1.442695
        %v533 = vpow.pop %v532
        %v534 = vmul.f32 %v508, 1.442695
        %v535 = vpow.pop %v534
        %v536 = vmul.f32 %v509, 1.442695
        %v537 = vpow.pop %v536
        %v538 = vmul.f32 %v510, 1.442695
        %v539 = vpow.pop %v538
        %v540 = vmul.f32 %v511, 1.442695
        %v541 = vpow.pop %v540
        %v542 = vmul.f32 %v512, 1.442695
        %v543 = vpow.pop %v542
        %v544 = vmul.f32 %v513, 1.442695
        %v545 = vpow.pop %v544
        %v546 = vld [vmem:[%s260] sm:$0xff]
        %v547 = vld [vmem:[%s260 + $0x8] sm:$0xff]
        %v548 = vld [vmem:[%s260 + $0x10] sm:$0xff]
        %v549 = vld [vmem:[%s260 + $0x18] sm:$0xff]
        %v550 = vld [vmem:[%s260 + $0x20] sm:$0xff]
        %v551 = vld [vmem:[%s260 + $0x28] sm:$0xff]
        %v552 = vld [vmem:[%s260 + $0x30] sm:$0xff]
        %v553 = vld [vmem:[%s260 + $0x38] sm:$0xff]
        %v554 = vld [vmem:[%s260 + $0x40] sm:$0xff]
        %v555 = vld [vmem:[%s260 + $0x48] sm:$0xff]
        %v556 = vld [vmem:[%s260 + $0x50] sm:$0xff]
        %v557 = vld [vmem:[%s260 + $0x58] sm:$0xff]
        %v558 = vld [vmem:[%s260 + $0x60] sm:$0xff]
        %v559 = vld [vmem:[%s260 + $0x68] sm:$0xff]
        %v560 = vld [vmem:[%s260 + $0x70] sm:$0xff]
        %v561 = vld [vmem:[%s260 + $0x78] sm:$0xff]
        %562 = vadd.xlane.f32.xlu0 %v515
        %v563 = vpop.xlane.xlu0 %562
        %564 = vadd.xlane.f32.xlu0 %v517
        %v565 = vpop.xlane.xlu0 %564
        %566 = vadd.xlane.f32.xlu0 %v519
        %v567 = vpop.xlane.xlu0 %566
        %568 = vadd.xlane.f32.xlu0 %v521
        %v569 = vpop.xlane.xlu0 %568
        %570 = vadd.xlane.f32.xlu0 %v523
        %v571 = vpop.xlane.xlu0 %570
        %572 = vadd.xlane.f32.xlu0 %v525
        %v573 = vpop.xlane.xlu0 %572
        %574 = vadd.xlane.f32.xlu0 %v527
        %v575 = vpop.xlane.xlu0 %574
        %576 = vadd.xlane.f32.xlu0 %v529
        %v577 = vpop.xlane.xlu0 %576
        %578 = vadd.xlane.f32.xlu0 %v531
        %v579 = vpop.xlane.xlu0 %578
        %580 = vadd.xlane.f32.xlu0 %v533
        %v581 = vpop.xlane.xlu0 %580
        %582 = vadd.xlane.f32.xlu0 %v535
        %v583 = vpop.xlane.xlu0 %582
        %584 = vadd.xlane.f32.xlu0 %v537
        %v585 = vpop.xlane.xlu0 %584
        %586 = vadd.xlane.f32.xlu0 %v539
        %v587 = vpop.xlane.xlu0 %586
        %588 = vadd.xlane.f32.xlu0 %v541
        %v589 = vpop.xlane.xlu0 %588
        %590 = vadd.xlane.f32.xlu0 %v543
        %v591 = vpop.xlane.xlu0 %590
        %592 = vadd.xlane.f32.xlu0 %v545
        %v593 = vpop.xlane.xlu0 %592
        %v594 = vadd.f32 %v546, %v563
        %v595 = vadd.f32 %v547, %v565
        %v596 = vadd.f32 %v548, %v567
        %v597 = vadd.f32 %v549, %v569
        %v598 = vadd.f32 %v550, %v571
        %v599 = vadd.f32 %v551, %v573
        %v600 = vadd.f32 %v552, %v575
        %v601 = vadd.f32 %v553, %v577
        %v602 = vadd.f32 %v554, %v579
        %v603 = vadd.f32 %v555, %v581
        %v604 = vadd.f32 %v556, %v583
        %v605 = vadd.f32 %v557, %v585
        %v606 = vadd.f32 %v558, %v587
        %v607 = vadd.f32 %v559, %v589
        %v608 = vadd.f32 %v560, %v591
        %v609 = vadd.f32 %v561, %v593
        %vm610 = vcmask 7168
        %611 = vst.msk [vmem:[%s260] sm:$0xff] %vm610, %v594
        %612 = vst.msk [vmem:[%s260 + $0x8] sm:$0xff] %vm610, %v595
        %613 = vst.msk [vmem:[%s260 + $0x10] sm:$0xff] %vm610, %v596
        %614 = vst.msk [vmem:[%s260 + $0x18] sm:$0xff] %vm610, %v597
        %615 = vst.msk [vmem:[%s260 + $0x20] sm:$0xff] %vm610, %v598
        %616 = vst.msk [vmem:[%s260 + $0x28] sm:$0xff] %vm610, %v599
        %617 = vst.msk [vmem:[%s260 + $0x30] sm:$0xff] %vm610, %v600
        %618 = vst.msk [vmem:[%s260 + $0x38] sm:$0xff] %vm610, %v601
        %619 = vst.msk [vmem:[%s260 + $0x40] sm:$0xff] %vm610, %v602
        %620 = vst.msk [vmem:[%s260 + $0x48] sm:$0xff] %vm610, %v603
        %621 = vst.msk [vmem:[%s260 + $0x50] sm:$0xff] %vm610, %v604
        %622 = vst.msk [vmem:[%s260 + $0x58] sm:$0xff] %vm610, %v605
        %623 = vst.msk [vmem:[%s260 + $0x60] sm:$0xff] %vm610, %v606
        %624 = vst.msk [vmem:[%s260 + $0x68] sm:$0xff] %vm610, %v607
        %625 = vst.msk [vmem:[%s260 + $0x70] sm:$0xff] %vm610, %v608
        %626 = vst.msk [vmem:[%s260 + $0x78] sm:$0xff] %vm610, %v609
        %v627 = vadd.f32 %v515, %v517
        %v628 = vadd.f32 %v627, %v519
        %v629 = vadd.f32 %v628, %v521
        %v630 = vadd.f32 %v629, %v523
        %v631 = vadd.f32 %v630, %v525
        %v632 = vadd.f32 %v631, %v527
        %v633 = vadd.f32 %v632, %v529
        %v634 = vadd.f32 %v633, %v531
        %v635 = vadd.f32 %v634, %v533
        %v636 = vadd.f32 %v635, %v535
        %v637 = vadd.f32 %v636, %v537
        %v638 = vadd.f32 %v637, %v539
        %v639 = vadd.f32 %v638, %v541
        %v640 = vadd.f32 %v639, %v543
        %v641 = vadd.f32 %v640, %v545
        %v642 = vrot.slane %v641, 4
        %v643 = vadd.f32 %v641, %v642
        %v644 = vrot.slane %v643, 2
        %v645 = vadd.f32 %v643, %v644
        %v646 = vrot.slane %v645, 1
        %v647 = vadd.f32 %v645, %v646
        %648 = vst [vmem:[%s233] sm:$0x1] %v647
        %s649 = smul.u32 16, %s24
        %p650 = scmp.lt.s32.totalorder %s23, 1
        %s651 = scalar_select %p650, %s23, 1
        %p652 = scmp.lt.s32.totalorder %s649, 31
        %s653 = scalar_select %p652, %s649, 31
        %s654 = smul.addr %s651, 32
        %s655 = sadd.s32 %s653, %s654
        %s656 = smul.addr %s655, 8
        %s657 = scalar_lea.vmem %s2, %s656
        %s658 = sand.u32 %s133, 1
        %s659 = scalar_lea.sflag [#allocation3], %s658
        %s660 = sand.u32 %s133, 1
        %s661 = scalar_lea.vmem [#allocation2], %s660
        // Predicated region
        $region33: #{tpu_custom_call.1} parent=27 // pred_check
          %p662 = pneg %p113
        $region34: #{tpu_custom_call.1} parent=27 // pred_check_branch
          %664 = sbr.rel (%p662) target = $region36
        $region35: #{tpu_custom_call.1} parent=27 // pred_region
          %s665 = smul.u32 16, %s24
        $region36: #{tpu_custom_call.1} parent=27 // pred_fallthru
          _
        // Predicated region
        $region37: #{tpu_custom_call.1} parent=27 // pred_check
          %p666 = pneg %p143
        $region38: #{tpu_custom_call.1} parent=27 // pred_check_branch
          %668 = sbr.rel (%p666) target = $region40
        $region39: #{tpu_custom_call.1} parent=27 // pred_region
          %s670 = ssub.s32 16, 16
          %671 = vsyncadd %s659, %s670
          %s672 = smul.addr %s24, 2
          %s673 = sadd.s32 %s25, %s672
          %s674 = smul.addr %s23, 4
          %s675 = sadd.s32 %s673, %s674
          %s676 = smul.addr %s675, 16
          %s677 = scalar_lea.hbm %s3, %s676
          %s679 = sshll.u32 %s661, 4
          %s680 = int_to_ptr.vmem [resolvable:$true] %s679
          %682 = dma.vmem_to_hbm [thread:$0]  %s680, 16, %s677, %s659
        $region40: #{tpu_custom_call.1} parent=27 // pred_fallthru
          _
      $region28: #{tpu_custom_call.1} parent=5 // pred_fallthru
        _
      %p683 = scmp.le.s32.totalorder 2, %s13
      // Predicated region
      $region41: #{tpu_custom_call.1} parent=5 // pred_check
        %p684 = pneg %p683
      $region42: #{tpu_custom_call.1} parent=5 // pred_check_branch
        %686 = sbr.rel (%p684) target = $region44
      $region43: #{tpu_custom_call.1} parent=5 // pred_region
        %s687 = ssub.s32 %s13, 2
        // Predicated region
        $region45: #{tpu_custom_call.1} parent=43 // pred_check
          %p688 = pneg %p119
        $region46: #{tpu_custom_call.1} parent=43 // pred_check_branch
          %690 = sbr.rel (%p688) target = $region48
        $region47: #{tpu_custom_call.1} parent=43 // pred_region
          %s691 = smul.u32 16, %s27
          %p692 = scmp.lt.s32.totalorder %s26, 1
          %s693 = scalar_select %p692, %s26, 1
          %p694 = scmp.lt.s32.totalorder %s691, 31
          %s695 = scalar_select %p694, %s691, 31
          %s696 = smul.addr %s693, 32
          %s697 = sadd.s32 %s695, %s696
          %s698 = smul.addr %s697, 8
          %s699 = scalar_lea.vmem %s2, %s698
        $region48: #{tpu_custom_call.1} parent=43 // pred_fallthru
          _
        // Predicated region
        $region49: #{tpu_custom_call.1} parent=43 // pred_check
          %p700 = pneg %p149
        $region50: #{tpu_custom_call.1} parent=43 // pred_check_branch
          %702 = sbr.rel (%p700) target = $region52
        $region51: #{tpu_custom_call.1} parent=43 // pred_region
          %s703 = sand.u32 %s134, 1
          %s704 = scalar_lea.sflag [#allocation3], %s703
          %s705 = sand.u32 %s134, 1
          %s706 = scalar_lea.vmem [#allocation2], %s705
          %707 = dma.done %s704, 16
        $region52: #{tpu_custom_call.1} parent=43 // pred_fallthru
          _
      $region44: #{tpu_custom_call.1} parent=5 // pred_fallthru
        _
    $region6: #{tpu_custom_call.1} parent=1 // loop_footer
      %s17 = sadd.s32 1, %s13
    $region7: #{tpu_custom_call.1} parent=1 // loop_footer_branch
      %12 = sbr.rel target = $region3
    $region8: #{tpu_custom_call.1} parent=1 // loop_exit
      _
    %708 = vsyncpa [#allocation3], 1
    %s709 = scalar_lea.sflag [#allocation3], 1
    %710 = vsyncpa %s709, 1

</llo_original>
